<compile_context>
chip_gen: v7x
topology: tpu7x:2x2x1
jax: 0.10.0
libtpu: 0.0.40
codegen_flags: <defaults>
</compile_context>

<pallas_src>
import functools

import jax
import jax.numpy as jnp
from jax.experimental import pallas as pl
from jax.experimental.pallas import tpu as pltpu


def _emd_loss_kernel(x_ref, t_ref, out_ref, acc_ref, tri_ref, *,
                     n_rows, n_total, mask_rows):
    # x_ref, t_ref : (TILE_N, K) tiles in VMEM (native input dtype)
    # out_ref      : (1, 1) f32 scalar result in SMEM
    # acc_ref      : (1,)  f32 running sum-of-squares in SMEM (persists across grid)
    # tri_ref      : (K, K) f32 upper-triangular ones matrix in VMEM (persists)
    i = pl.program_id(0)
    tile_n, k = x_ref.shape

    @pl.when(i == 0)
    def _():
        acc_ref[0] = jnp.float32(0.0)
        # tri[j, c] = 1 if j <= c, so (d @ tri)[n, c] = cumsum(d, axis=1)[n, c].
        rj = jax.lax.broadcasted_iota(jnp.int32, (k, k), 0)
        cj = jax.lax.broadcasted_iota(jnp.int32, (k, k), 1)
        tri_ref[...] = (rj <= cj).astype(jnp.float32)

    # Cast after load: HBM->VMEM DMA stays in the native input dtype.
    d = x_ref[...].astype(jnp.float32) - t_ref[...].astype(jnp.float32)

    if mask_rows:
        # Mask rows past the true N so remainder-tile padding never contributes.
        row_ids = i * tile_n + jax.lax.broadcasted_iota(jnp.int32, (tile_n, k), 0)
        d = jnp.where(row_ids < n_rows, d, jnp.float32(0.0))

    # One MXU matmul: cumulative difference for this tile.
    c = jnp.dot(d, tri_ref[...], preferred_element_type=jnp.float32)
    acc_ref[0] += jnp.sum(c * c)

    @pl.when(i == pl.num_programs(0) - 1)
    def _():
        out_ref[0, 0] = acc_ref[0] / jnp.float32(n_total)


def earth_mover_distance_loss(inp, tgt, *, tile_n=None):
    """EMD loss (MSE of cumulative histograms). inp, tgt: (N, K)."""
    assert inp.shape == tgt.shape and inp.ndim == 2
    N, K = inp.shape
    itemsize = jnp.dtype(inp.dtype).itemsize

    if tile_n is None:
        # 2 inputs x 2 pipeline buffers per tile; keep them within ~24 MiB of
        # VMEM and cap at 2048 rows. Bigger tiles amortize per-step overhead.
        budget = 24 << 20
        tile_n = budget // (4 * K * itemsize)
        tile_n = max(8, min(2048, (tile_n // 8) * 8))

    # Block-shape rules: second-to-last dim must be a multiple of 8 or equal
    # the full dim; last dim (K) equals the full array dim so it is always OK.
    if tile_n >= N:
        tile_n = N
    else:
        tile_n = max(8, (tile_n // 8) * 8)

    num_tiles = pl.cdiv(N, tile_n)
    mask_rows = (N % tile_n) != 0

    kernel = functools.partial(
        _emd_loss_kernel, n_rows=N, n_total=N * K, mask_rows=mask_rows)

    out = pl.pallas_call(
        kernel,
        out_shape=jax.ShapeDtypeStruct((1, 1), jnp.float32),
        grid_spec=pltpu.PrefetchScalarGridSpec(
            num_scalar_prefetch=0,
            grid=(num_tiles,),
            in_specs=[
                pl.BlockSpec((tile_n, K), lambda i: (i, 0)),
                pl.BlockSpec((tile_n, K), lambda i: (i, 0)),
            ],
            out_specs=pl.BlockSpec(memory_space=pltpu.SMEM),
            scratch_shapes=[
                pltpu.SMEM((1,), jnp.float32),       # running sum of squares
                pltpu.VMEM((K, K), jnp.float32),     # cached triangular matrix
            ],
        ),
        compiler_params=pltpu.CompilerParams(
            dimension_semantics=("arbitrary",),   # accumulation across tiles
            vmem_limit_bytes=64 << 20,            # safe on v7x (64 MiB) and below
        ),
    )(inp, tgt)
    return out[0, 0]


if __name__ == "__main__":
    key = jax.random.PRNGKey(0)
    k1, k2 = jax.random.split(key)

    # Small histogram shapes; N deliberately NOT a multiple of the tile size
    # so the remainder-tile masking path is exercised (grid = 4 steps).
    N, K = 50, 32
    inp = jax.random.uniform(k1, (N, K), dtype=jnp.float32)
    tgt = jax.random.uniform(k2, (N, K), dtype=jnp.float32)

    loss = earth_mover_distance_loss(inp, tgt, tile_n=16)
    loss = jax.block_until_ready(loss)

    # Pure-JAX reference check (same math as the PyTorch module).
    ref = jnp.mean((jnp.cumsum(inp, axis=1) - jnp.cumsum(tgt, axis=1)) ** 2)
    assert jnp.allclose(loss, ref, rtol=1e-5, atol=1e-5), (loss, ref)

    # Also exercise the aligned (no-masking, auto tile) fast path.
    inp2 = jax.random.uniform(k1, (64, K), dtype=jnp.float32)
    tgt2 = jax.random.uniform(k2, (64, K), dtype=jnp.float32)
    loss2 = jax.block_until_ready(earth_mover_distance_loss(inp2, tgt2))
    ref2 = jnp.mean((jnp.cumsum(inp2, axis=1) - jnp.cumsum(tgt2, axis=1)) ** 2)
    assert jnp.allclose(loss2, ref2, rtol=1e-5, atol=1e-5), (loss2, ref2)

    print("KERNEL_OK")
</pallas_src>

<mosaic_0001>
module attributes {stable_mosaic.version = 11 : i64} {
  func.func @_emd_loss_kernel(%arg0: i32, %arg1: memref<16x32xf32, #tpu.memory_space<vmem>>, %arg2: memref<16x32xf32, #tpu.memory_space<vmem>>, %arg3: memref<1x1xf32, #tpu.memory_space<smem>>, %arg4: memref<1xf32, #tpu.memory_space<smem>>, %arg5: memref<32x32xf32, #tpu.memory_space<vmem>>) attributes {dimension_semantics = [#tpu.dimension_semantics<arbitrary>], iteration_bounds = array<i64: 4>, scalar_prefetch = 0 : i64, scratch_operands = 2 : i64, tpu.core_type = #tpu.core_type<tc>, window_params = [{transform_indices = @transform_0, window_bounds = array<i64: 16, 32>}, {transform_indices = @transform_1, window_bounds = array<i64: 16, 32>}, {transform_indices = @transform_2, window_bounds = array<i64: 1, 1>}]} {
    %c0_i32 = arith.constant 0 : i32
    %0 = arith.cmpi eq, %arg0, %c0_i32 : i32
    %1 = arith.extui %0 : i1 to i32
    %c0_i32_0 = arith.constant 0 : i32
    %2 = arith.cmpi ne, %1, %c0_i32_0 : i32
    scf.if %2 {
      %cst_11 = arith.constant 0.000000e+00 : f32
      %c0_12 = arith.constant 0 : index
      %27 = memref.load %arg4[%c0_12] : memref<1xf32, #tpu.memory_space<smem>>
      memref.store %cst_11, %arg4[%c0_12] : memref<1xf32, #tpu.memory_space<smem>>
      %28 = tpu.iota {dimensions = array<i32: 0>} : vector<32x32xi32>
      %29 = tpu.iota {dimensions = array<i32: 1>} : vector<32x32xi32>
      %30 = arith.cmpi sle, %28, %29 : vector<32x32xi32>
      %31 = arith.extui %30 : vector<32x32xi1> to vector<32x32xi32>
      %32 = arith.sitofp %31 : vector<32x32xi32> to vector<32x32xf32>
      %c0_13 = arith.constant 0 : index
      %c0_14 = arith.constant 0 : index
      %33 = vector.load %arg5[%c0_13, %c0_14] : memref<32x32xf32, #tpu.memory_space<vmem>>, vector<32x32xf32>
      tpu.vector_store %arg5[%c0_13, %c0_14], %32 {strides = array<i32>} : memref<32x32xf32, #tpu.memory_space<vmem>>, vector<32x32xf32>,
    } else {
    }
    %c0 = arith.constant 0 : index
    %c0_1 = arith.constant 0 : index
    %3 = vector.load %arg1[%c0, %c0_1] : memref<16x32xf32, #tpu.memory_space<vmem>>, vector<16x32xf32>
    %c0_2 = arith.constant 0 : index
    %c0_3 = arith.constant 0 : index
    %4 = vector.load %arg2[%c0_2, %c0_3] : memref<16x32xf32, #tpu.memory_space<vmem>>, vector<16x32xf32>
    %5 = arith.subf %3, %4 : vector<16x32xf32>
    %c16_i32 = arith.constant 16 : i32
    %6 = arith.muli %arg0, %c16_i32 : i32
    %7 = tpu.iota {dimensions = array<i32: 0>} : vector<16x32xi32>
    %8 = vector.broadcast %6 : i32 to vector<16x32xi32>
    %9 = arith.addi %8, %7 : vector<16x32xi32>
    %c50_i32 = arith.constant 50 : i32
    %10 = vector.broadcast %c50_i32 : i32 to vector<16x32xi32>
    %11 = arith.cmpi slt, %9, %10 : vector<16x32xi32>
    %cst = arith.constant 0.000000e+00 : f32
    %12 = vector.broadcast %cst : f32 to vector<16x32xf32>
    %13 = arith.select %11, %5, %12 : vector<16x32xi1>, vector<16x32xf32>
    %c0_4 = arith.constant 0 : index
    %c0_5 = arith.constant 0 : index
    %14 = vector.load %arg5[%c0_4, %c0_5] : memref<32x32xf32, #tpu.memory_space<vmem>>, vector<32x32xf32>
    %cst_6 = arith.constant dense<0.000000e+00> : vector<16x32xf32>
    %15 = tpu.matmul %13, %14, %cst_6 {dimension_numbers = #tpu.dot_dimension_numbers<[1], [0], [0], [1], [0, 0, 1, 1], [], []>} : vector<16x32xf32>, vector<32x32xf32>, vector<16x32xf32> -> vector<16x32xf32>
    %c0_7 = arith.constant 0 : index
    %16 = memref.load %arg4[%c0_7] : memref<1xf32, #tpu.memory_space<smem>>
    %17 = arith.mulf %15, %15 : vector<16x32xf32>
    %18 = vector.shape_cast %17 : vector<16x32xf32> to vector<1x16x32xf32>
    %cst_8 = arith.constant dense<0.000000e+00> : vector<1xf32>
    %19 = vector.multi_reduction <add>, %18, %cst_8 [1, 2] : vector<1x16x32xf32> to vector<1xf32>
    %20 = vector.shape_cast %19 : vector<1xf32> to vector<1x1x1xf32>
    %21 = vector.extract %20[0, 0, 0] : f32 from vector<1x1x1xf32>
    %22 = arith.addf %16, %21 : f32
    %c0_9 = arith.constant 0 : index
    %23 = memref.load %arg4[%c0_9] : memref<1xf32, #tpu.memory_space<smem>>
    memref.store %22, %arg4[%c0_9] : memref<1xf32, #tpu.memory_space<smem>>
    %c3_i32 = arith.constant 3 : i32
    %24 = arith.cmpi eq, %arg0, %c3_i32 : i32
    %25 = arith.extui %24 : i1 to i32
    %c0_i32_10 = arith.constant 0 : i32
    %26 = arith.cmpi ne, %25, %c0_i32_10 : i32
    scf.if %26 {
      %c0_11 = arith.constant 0 : index
      %27 = memref.load %arg4[%c0_11] : memref<1xf32, #tpu.memory_space<smem>>
      %cst_12 = arith.constant 1.600000e+03 : f32
      %28 = arith.divf %27, %cst_12 : f32
      %c0_13 = arith.constant 0 : index
      %c0_14 = arith.constant 0 : index
      %29 = memref.load %arg3[%c0_13, %c0_14] : memref<1x1xf32, #tpu.memory_space<smem>>
      memref.store %28, %arg3[%c0_13, %c0_14] : memref<1x1xf32, #tpu.memory_space<smem>>
    } else {
    }
    return
  }
  func.func @transform_0(%arg0: i32) -> (i32, i32) {
    %c0_i32 = arith.constant 0 : i32
    %c0_i32_0 = arith.constant 0 : i32
    return %arg0, %c0_i32 : i32, i32
  }
  func.func @transform_1(%arg0: i32) -> (i32, i32) {
    %c0_i32 = arith.constant 0 : i32
    %c0_i32_0 = arith.constant 0 : i32
    return %arg0, %c0_i32 : i32, i32
  }
  func.func @transform_2(%arg0: i32) -> (i32, i32) {
    %c0_i32 = arith.constant 0 : i32
    %c0_i32_0 = arith.constant 0 : i32
    %c0_i32_1 = arith.constant 0 : i32
    return %c0_i32, %c0_i32_0 : i32, i32
  }
}

</mosaic_0001>

<llo_original>
// kernel: tpu_custom_call.1
$region0: #{tpu_custom_call.1}
  #allocation0 [shape = 'u32[]', space=smem, size = 0x4, offset = 0x4, fixed_abs, tag = 'smem constant byte address 0x4 - core index']
  #allocation1 [shape = 'u32[144,128]{1,0:T(1,128)}', space=vmem, size = 0x12000, scoped, tag = 'internal scratch']
  #allocation2 [shape = 'f32[1]{0:T(128)}', space=smem, size = 0x200, scoped, tag = 'scratch operand']
  #allocation3 [shape = 'f32[32,32]{1,0:T(8,128)}', space=vmem, size = 0x4000, scoped, tag = 'scratch operand']
  %s0 = inlined_call_operand.hbm [shape: f32[50,32], index: 0, kind: input, shape index: {}]
  %s1 = inlined_call_operand.hbm [shape: f32[50,32], index: 1, kind: input, shape index: {}]
  %s2 = inlined_call_operand.hbm [shape: f32[1,1], index: 2, kind: output, shape index: {}]
  %s3 = sld [smem:[#allocation0]]
  $region57: #{tpu_custom_call.1} parent=0
    _
  %s5 = ssub.s32 1, %s3
  %s6 = scalar_select 0, %s5, %s3
  $region1: #{tpu_custom_call.1} parent=0
    #allocation4 [shape = 'u8[16384]{0}', space=vmem, size = 0x4000, scoped, tag = 'input window, operand 0']
    #allocation5 [shape = 's32[2]{0}', space=sflag, size = 0x8, scoped, tag = 'scoped memory for tpu_custom_call.1']
    #allocation6 [shape = 's32[2]{0}', space=sflag, size = 0x8, scoped, tag = 'scoped memory for tpu_custom_call.1']
    #allocation7 [shape = 'u8[16384]{0}', space=vmem, size = 0x4000, scoped, tag = 'input window, operand 1']
    #allocation8 [shape = 's32[2]{0}', space=sflag, size = 0x8, scoped, tag = 'scoped memory for tpu_custom_call.1']
    #allocation9 [shape = 'u8[512]{0}', space=smem, size = 0x200, scoped, tag = 'output window, operand 0, single buffered']
    %7 = vsyncpa [#allocation5], 0
    %s8 = scalar_lea.sflag [#allocation5], 1
    %9 = vsyncpa %s8, 0
    %10 = vsyncpa [#allocation8], 0
    %s11 = scalar_lea.sflag [#allocation8], 1
    %12 = vsyncpa %s11, 0
    %13 = vsyncpa [#allocation6], 0
    loop: start=0, step=1, limit=6
    $region2: #{tpu_custom_call.1} parent=1 // loop_pre_header
      _
    $region3: #{tpu_custom_call.1} parent=1 // loop_header
      %s15 = sphi 0, %s19
      %p16 = scmp.ge.s32.totalorder %s15, 6
      %s25 = sphi 0, %s27
      %s28 = sphi 0, %s25
      %s29 = sphi 0, %s28
      %s45 = sphi 0, %s29
      %s51 = sphi 0, %s53
      %s54 = sphi 0, %s51
      %s55 = sphi 0, %s54
      %s71 = sphi 0, %s55
      %s75 = sphi 0, %s75
      %s77 = sphi 0, %s75
      %s78 = sphi 0, %s77
      %s92 = sphi 0, %s78
    $region4: #{tpu_custom_call.1} parent=1 // loop_header_branch
      %18 = sbr.rel (%p16) target = $region8
    $region5: #{tpu_custom_call.1} parent=1 // loop_body
      %s20 = ssub.s32 %s15, 1
      %s21 = ssub.s32 %s15, 2
      %s22 = sadd.s32 %s15, 1
      %s23 = ssub.s32 %s15, %s22
      %p24 = scmp.eq.s32.totalorder %s23, 0
      %s26 = sadd.s32 %s25, 1
      %s27 = scalar_select %p24, %s25, %s26
      %p30 = pneg %p24
      %p31 = scmp.eq.s32.totalorder %s15, 3
      %p32 = por %p30, %p31
      %p33 = scmp.ne.s32.totalorder %s25, %s28
      %p34 = scmp.eq.s32.totalorder %s15, 0
      %p35 = por %p33, %p34
      %p36 = scmp.ne.s32.totalorder %s25, %s28
      %p37 = scmp.eq.s32.totalorder %s20, 3
      %p38 = por %p36, %p37
      %p39 = scmp.ne.s32.totalorder %s28, %s29
      %p40 = scmp.eq.s32.totalorder %s20, 0
      %p41 = por %p39, %p40
      %p42 = scmp.ne.s32.totalorder %s28, %s29
      %p43 = scmp.eq.s32.totalorder %s21, 3
      %p44 = por %p42, %p43
      %p46 = scmp.ne.s32.totalorder %s29, %s45
      %p47 = scmp.eq.s32.totalorder %s21, 0
      %p48 = por %p46, %p47
      %s49 = ssub.s32 %s15, %s22
      %p50 = scmp.eq.s32.totalorder %s49, 0
      %s52 = sadd.s32 %s51, 1
      %s53 = scalar_select %p50, %s51, %s52
      %p56 = pneg %p50
      %p57 = scmp.eq.s32.totalorder %s15, 3
      %p58 = por %p56, %p57
      %p59 = scmp.ne.s32.totalorder %s51, %s54
      %p60 = scmp.eq.s32.totalorder %s15, 0
      %p61 = por %p59, %p60
      %p62 = scmp.ne.s32.totalorder %s51, %s54
      %p63 = scmp.eq.s32.totalorder %s20, 3
      %p64 = por %p62, %p63
      %p65 = scmp.ne.s32.totalorder %s54, %s55
      %p66 = scmp.eq.s32.totalorder %s20, 0
      %p67 = por %p65, %p66
      %p68 = scmp.ne.s32.totalorder %s54, %s55
      %p69 = scmp.eq.s32.totalorder %s21, 3
      %p70 = por %p68, %p69
      %p72 = scmp.ne.s32.totalorder %s55, %s71
      %p73 = scmp.eq.s32.totalorder %s21, 0
      %p74 = por %p72, %p73
      %s76 = sadd.s32 %s75, 1
      %p79 = scmp.eq.s32.totalorder %s15, 3
      %p80 = scmp.ne.s32.totalorder %s75, %s77
      %p81 = scmp.eq.s32.totalorder %s15, 0
      %p82 = por %p80, %p81
      %p83 = scmp.ne.s32.totalorder %s75, %s77
      %p84 = scmp.eq.s32.totalorder %s20, 3
      %p85 = por %p83, %p84
      %p86 = scmp.ne.s32.totalorder %s77, %s78
      %p87 = scmp.eq.s32.totalorder %s20, 0
      %p88 = por %p86, %p87
      %p89 = scmp.ne.s32.totalorder %s77, %s78
      %p90 = scmp.eq.s32.totalorder %s21, 3
      %p91 = por %p89, %p90
      %p93 = scmp.ne.s32.totalorder %s78, %s92
      %p94 = scmp.eq.s32.totalorder %s21, 0
      %p95 = por %p93, %p94
      %p96 = scmp.le.s32.totalorder 1, %s15
      %p97 = scmp.lt.s32.totalorder %s15, 5
      %p98 = pnand %p96, %p97
      %p99 = pneg %p98
      // Predicated region
      $region9: #{tpu_custom_call.1} parent=5 // pred_check
        _
      $region10: #{tpu_custom_call.1} parent=5 // pred_check_branch
        %101 = sbr.rel (%p98) target = $region12
      $region11: #{tpu_custom_call.1} parent=5 // pred_region
        %s102 = ssub.s32 %s15, 1
      $region12: #{tpu_custom_call.1} parent=5 // pred_fallthru
        _
      %p103 = scmp.lt.s32.totalorder %s15, 4
      // Predicated region
      $region13: #{tpu_custom_call.1} parent=5 // pred_check
        %p104 = pneg %p103
      $region14: #{tpu_custom_call.1} parent=5 // pred_check_branch
        %106 = sbr.rel (%p104) target = $region16
      $region15: #{tpu_custom_call.1} parent=5 // pred_region
        // Predicated region
        $region17: #{tpu_custom_call.1} parent=15 // pred_check
          %p107 = pneg %p35
        $region18: #{tpu_custom_call.1} parent=15 // pred_check_branch
          %109 = sbr.rel (%p107) target = $region20
        $region19: #{tpu_custom_call.1} parent=15 // pred_region
          %s110 = sand.u32 %s25, 1
          %s111 = scalar_lea.sflag [#allocation5], %s110
          %s112 = sand.u32 %s25, 1
          %s113 = smul.addr %s112, 16
          %s114 = scalar_lea.vmem [#allocation4], %s113
          %s115 = smul.u32 2, %s15
          %s116 = ssub.s32 7, %s115
          %p117 = scmp.lt.s32.totalorder %s116, 2
          %s118 = scalar_select %p117, %s116, 2
          %s119 = smul.u32 128, %s118
          %s121 = ssub.s32 256, %s119
          %122 = vsyncadd %s111, %s121
          %p123 = scmp.ne.s32.totalorder 0, %s119
          %s124 = smul.addr %s115, 128
          %s125 = scalar_lea.hbm %s0, %s124
          %s126 = smul.u32 8, %s118
          %s127 = sshll.u32 %s114, 4
          %s128 = int_to_ptr.vmem [resolvable:$true] %s127
          %s129 = sshll.u32 %s126, 4
          %133 = dma.hbm_to_vmem [thread:$0]  (%p123), %s125, %s129, %s128, %s111, 128, 128, 8
        $region20: #{tpu_custom_call.1} parent=15 // pred_fallthru
          _
        // Predicated region
        $region21: #{tpu_custom_call.1} parent=15 // pred_check
          %p134 = pneg %p61
        $region22: #{tpu_custom_call.1} parent=15 // pred_check_branch
          %136 = sbr.rel (%p134) target = $region24
        $region23: #{tpu_custom_call.1} parent=15 // pred_region
          %s137 = sand.u32 %s51, 1
          %s138 = scalar_lea.sflag [#allocation8], %s137
          %s139 = sand.u32 %s51, 1
          %s140 = smul.addr %s139, 16
          %s141 = scalar_lea.vmem [#allocation7], %s140
          %s142 = smul.u32 2, %s15
          %s143 = ssub.s32 7, %s142
          %p144 = scmp.lt.s32.totalorder %s143, 2
          %s145 = scalar_select %p144, %s143, 2
          %s146 = smul.u32 128, %s145
          %s148 = ssub.s32 256, %s146
          %149 = vsyncadd %s138, %s148
          %p150 = scmp.ne.s32.totalorder 0, %s146
          %s151 = smul.addr %s142, 128
          %s152 = scalar_lea.hbm %s1, %s151
          %s153 = smul.u32 8, %s145
          %s154 = sshll.u32 %s141, 4
          %s155 = int_to_ptr.vmem [resolvable:$true] %s154
          %s156 = sshll.u32 %s153, 4
          %160 = dma.hbm_to_vmem [thread:$0]  (%p150), %s152, %s156, %s155, %s138, 128, 128, 8
        $region24: #{tpu_custom_call.1} parent=15 // pred_fallthru
          _
      $region16: #{tpu_custom_call.1} parent=5 // pred_fallthru
        _
      %p161 = scmp.le.s32.totalorder 1, %s15
      %p162 = scmp.lt.s32.totalorder %s15, 5
      %p163 = pnand %p161, %p162
      %p164 = pneg %p163
      // Predicated region
      $region25: #{tpu_custom_call.1} parent=5 // pred_check
        _
      $region26: #{tpu_custom_call.1} parent=5 // pred_check_branch
        %166 = sbr.rel (%p163) target = $region28
      $region27: #{tpu_custom_call.1} parent=5 // pred_region
        %s167 = ssub.s32 %s15, 1
        %s168 = sand.u32 %s28, 1
        %s169 = scalar_lea.sflag [#allocation5], %s168
        %s170 = sand.u32 %s28, 1
        %s171 = smul.addr %s170, 16
        %s172 = scalar_lea.vmem [#allocation4], %s171
        // Predicated region
        $region29: #{tpu_custom_call.1} parent=27 // pred_check
          %p173 = pneg %p41
        $region30: #{tpu_custom_call.1} parent=27 // pred_check_branch
          %175 = sbr.rel (%p173) target = $region32
        $region31: #{tpu_custom_call.1} parent=27 // pred_region
          %176 = dma.done %s169, 256
        $region32: #{tpu_custom_call.1} parent=27 // pred_fallthru
          _
        %s177 = sand.u32 %s54, 1
        %s178 = scalar_lea.sflag [#allocation8], %s177
        %s179 = sand.u32 %s54, 1
        %s180 = smul.addr %s179, 16
        %s181 = scalar_lea.vmem [#allocation7], %s180
        // Predicated region
        $region33: #{tpu_custom_call.1} parent=27 // pred_check
          %p182 = pneg %p67
        $region34: #{tpu_custom_call.1} parent=27 // pred_check_branch
          %184 = sbr.rel (%p182) target = $region36
        $region35: #{tpu_custom_call.1} parent=27 // pred_region
          %185 = dma.done %s178, 256
        $region36: #{tpu_custom_call.1} parent=27 // pred_fallthru
          _
        %s186 = sand.u32 %s28, 1
        %s187 = scalar_lea.sflag [#allocation5], %s186
        %s188 = sand.u32 %s28, 1
        %s189 = smul.addr %s188, 16
        %s190 = scalar_lea.vmem [#allocation4], %s189
        %p191 = pneg %p41
        %p192 = pneg %p38
        %s193 = sand.u32 %s54, 1
        %s194 = scalar_lea.sflag [#allocation8], %s193
        %s195 = sand.u32 %s54, 1
        %s196 = smul.addr %s195, 16
        %s197 = scalar_lea.vmem [#allocation7], %s196
        %p198 = pneg %p67
        %p199 = pneg %p64
        %p200 = pneg %p88
        %p201 = pneg %p85
        %s202 = smul.u32 2, %s20
        %s203 = ssub.s32 7, %s202
        %p204 = scmp.lt.s32.totalorder %s203, 2
        %s205 = scalar_select %p204, %s203, 2
        %s206 = smul.u32 128, %s205
        %s207 = smul.u32 2, %s20
        %s208 = ssub.s32 7, %s207
        %p209 = scmp.lt.s32.totalorder %s208, 2
        %s210 = scalar_select %p209, %s208, 2
        %s211 = smul.u32 128, %s210
        %p212 = scmp.eq.s32.totalorder %s20, 0
        // Predicated region
        $region37: #{tpu_custom_call.1} parent=27 // pred_check
          %p213 = pneg %p212
        $region38: #{tpu_custom_call.1} parent=27 // pred_check_branch
          %215 = sbr.rel (%p213) target = $region40
        $region39: #{tpu_custom_call.1} parent=27 // pred_region
          %s216 = scalar_lea.smem [#allocation2], 0
          %217 = sst [smem:[%s216]] 0.0
          %v218 = vlaneseq
          %v219 = vshrl.u32 %v218, 7
          %v220 = vadd.s32 %v219, 8
          %v221 = vadd.s32 %v219, 16
          %v222 = vadd.s32 %v219, 24
          %v223 = vlaneseq
          %v224 = vand.u32 %v223, 127
          %vm225 = vcmp.le.s32.totalorder %v219, %v224
          %vm226 = vcmp.le.s32.totalorder %v220, %v224
          %vm227 = vcmp.le.s32.totalorder %v221, %v224
          %vm228 = vcmp.le.s32.totalorder %v222, %v224
          %v229 = vsel %vm225, 1, 0
          %v230 = vsel %vm226, 1, 0
          %v231 = vsel %vm227, 1, 0
          %v232 = vsel %vm228, 1, 0
          %v233 = vcvt.s32.f32 %v229
          %v234 = vcvt.s32.f32 %v230
          %v235 = vcvt.s32.f32 %v231
          %v236 = vcvt.s32.f32 %v232
          %vm237 = vcmask 261120
          %238 = vst.msk [vmem:[#allocation3] sm:$0xff] %vm237, %v233
          %239 = vst.msk [vmem:[#allocation3 + $0x8] sm:$0xff] %vm237, %v234
          %240 = vst.msk [vmem:[#allocation3 + $0x10] sm:$0xff] %vm237, %v235
          %241 = vst.msk [vmem:[#allocation3 + $0x18] sm:$0xff] %vm237, %v236
        $region40: #{tpu_custom_call.1} parent=27 // pred_fallthru
          _
        %v242 = vld [vmem:[%s172] sm:$0xff]
        %v243 = vld [vmem:[%s172 + $0x8] sm:$0xff]
        %v244 = vld [vmem:[%s181] sm:$0xff]
        %v245 = vld [vmem:[%s181 + $0x8] sm:$0xff]
        %v246 = vsub.f32 %v242, %v244
        %v247 = vsub.f32 %v243, %v245
        %s248 = smul.u32 %s20, 16
        %v249 = vlaneseq
        %v250 = vshrl.u32 %v249, 7
        %v251 = vadd.s32 %v250, 8
        %v252 = vstv %s248
        %v253 = vadd.s32 %v252, %v250
        %v254 = vadd.s32 %v252, %v251
        %vm255 = vcmp.lt.s32.totalorder %v253, 50
        %vm256 = vcmp.lt.s32.totalorder %v254, 50
        %v257 = vsel %vm255, %v246, 0.0
        %v258 = vsel %vm256, %v247, 0.0
        %v259 = vld [vmem:[#allocation3] sm:$0xff]
        %v260 = vld [vmem:[#allocation3 + $0x8] sm:$0xff]
        %v261 = vld [vmem:[#allocation3 + $0x10] sm:$0xff]
        %v262 = vld [vmem:[#allocation3 + $0x18] sm:$0xff]
        %vm263 = vcmask 261120
        %v265 = vsel %vm263, %v257, 0
        %v268 = vsel %vm263, %v258, 0
        %270 = vmatprep.subr.mxu0 0.0
        %271 = vmatpush1.msra.mxu0 %v259
        %272 = vmatprep.subr.mxu0 0.0
        %273 = vmatpush1.msra.mxu0 %v260
        %274 = vmatprep.subr.mxu0 0.0
        %275 = vmatpush1.msra.mxu0 %v261
        %276 = vmatprep.subr.mxu0 0.0
        %277 = vmatpush1.msra.mxu0 %v262
        %278 = vmatprep.subr.mxu0 0.0
        %279 = vmatpush1.msra.mxu0 0.0
        %280 = vmatprep.subr.mxu0 0.0
        %281 = vmatpush1.msra.mxu0 0.0
        %282 = vmatprep.subr.mxu0 0.0
        %283 = vmatpush1.msra.mxu0 0.0
        %284 = vmatprep.subr.mxu0 0.0
        %285 = vmatpush1.msra.mxu0 0.0
        %286 = vmatprep.subr.mxu0 0.0
        %287 = vmatpush1.msra.mxu0 0.0
        %288 = vmatprep.subr.mxu0 0.0
        %289 = vmatpush1.msra.mxu0 0.0
        %290 = vmatprep.subr.mxu0 0.0
        %291 = vmatpush1.msra.mxu0 0.0
        %292 = vmatprep.subr.mxu0 0.0
        %293 = vmatpush1.msra.mxu0 0.0
        %294 = vmatprep.subr.mxu0 0.0
        %295 = vmatpush1.msra.mxu0 0.0
        %296 = vmatprep.subr.mxu0 0.0
        %297 = vmatpush1.msra.mxu0 0.0
        %298 = vmatprep.subr.mxu0 0.0
        %299 = vmatpush1.msra.mxu0 0.0
        %300 = vmatprep.subr.mxu0 0.0
        %301 = vmatpush1.msra.mxu0 0.0
        %302 = vmatprep.subr.mxu0 0.0
        %303 = vmatpush1.msra.mxu0 0.0
        %304 = vmatprep.subr.mxu0 0.0
        %305 = vmatpush1.msra.mxu0 0.0
        %306 = vmatprep.subr.mxu0 0.0
        %307 = vmatpush1.msra.mxu0 0.0
        %308 = vmatprep.subr.mxu0 0.0
        %309 = vmatpush1.msra.mxu0 0.0
        %310 = vmatprep.subr.mxu0 0.0
        %311 = vmatpush1.msra.mxu0 0.0
        %312 = vmatprep.subr.mxu0 0.0
        %313 = vmatpush1.msra.mxu0 0.0
        %314 = vmatprep.subr.mxu0 0.0
        %315 = vmatpush1.msra.mxu0 0.0
        %316 = vmatprep.subr.mxu0 0.0
        %317 = vmatpush1.msra.mxu0 0.0
        %318 = vmatprep.subr.mxu0 0.0
        %319 = vmatpush1.msra.mxu0 0.0
        %320 = vmatprep.subr.mxu0 0.0
        %321 = vmatpush1.msra.mxu0 0.0
        %322 = vmatprep.subr.mxu0 0.0
        %323 = vmatpush1.msra.mxu0 0.0
        %324 = vmatprep.subr.mxu0 0.0
        %325 = vmatpush1.msra.mxu0 0.0
        %326 = vmatprep.subr.mxu0 0.0
        %327 = vmatpush1.msra.mxu0 0.0
        %328 = vmatprep.subr.mxu0 0.0
        %329 = vmatpush1.msra.mxu0 0.0
        %330 = vmatprep.subr.mxu0 0.0
        %331 = vmatpush1.msra.mxu0 0.0
        %332 = vmatprep.subr.mxu0 0.0
        %333 = vmatpush1.msra.mxu0 0.0
        %334 = vmatprep.mubr.f32.mxu0 0.0
        %335 = vmatmul.mubr.f32.gmra.mrb[0].mxu0 %v265
        %v336 = vpop.f32.mrb[0].mxu0
        %v337 = vadd.f32 0.0, %v336
        %v338 = vpop.f32.mrb[0].mxu0
        %339 = vmatprep.mubr.f32.mxu0 0.0
        %340 = vmatmul.mubr.f32.gmra.mrb[0].mxu0 %v268
        %v341 = vpop.f32.mrb[0].mxu0
        %v342 = vadd.f32 0.0, %v341
        %v343 = vpop.f32.mrb[0].mxu0
        %344 = vdwg.mxu0
        %s345 = sld [smem:[#allocation2]]
        %v346 = vmul.f32 %v337, %v337
        %v347 = vmul.f32 %v342, %v342
        %v348 = vsel %vm263, %v346, 0.0
        %v349 = vsel %vm263, %v347, 0.0
        %v350 = vadd.f32 %v348, %v349
        %351 = vadd.xlane.f32.xlu0 %v350
        %v352 = vpop.xlane.xlu0 %351
        %v353 = vrot.slane %v352, 4
        %v354 = vadd.f32 %v352, %v353
        %v355 = vrot.slane %v354, 2
        %v356 = vadd.f32 %v354, %v355
        %v357 = vrot.slane %v356, 1
        %v358 = vadd.f32 %v356, %v357
        %s359 = vtos %v358
        %s360 = sadd.f32 %s345, %s359
        %s361 = scalar_lea.smem [#allocation2], 0
        %362 = sst [smem:[%s361]] %s360
        %p363 = scmp.eq.s32.totalorder %s20, 3
        // Predicated region
        $region41: #{tpu_custom_call.1} parent=27 // pred_check
          %p364 = pneg %p363
        $region42: #{tpu_custom_call.1} parent=27 // pred_check_branch
          %366 = sbr.rel (%p364) target = $region44
        $region43: #{tpu_custom_call.1} parent=27 // pred_region
          %s367 = sld [smem:[#allocation2]]
          %v368 = vrcp.pop 1600.0
          %s369 = vtos %v368
          %s370 = smul.f32 %s367, %s369
          %s371 = scalar_lea.smem [#allocation9], 0
          %372 = sst [smem:[%s371]] %s370
        $region44: #{tpu_custom_call.1} parent=27 // pred_fallthru
          _
        // Predicated region
        $region45: #{tpu_custom_call.1} parent=27 // pred_check
          %p373 = pneg %p85
        $region46: #{tpu_custom_call.1} parent=27 // pred_check_branch
          %375 = sbr.rel (%p373) target = $region48
        $region47: #{tpu_custom_call.1} parent=27 // pred_region
          %s377 = ssub.s32 16, 16
          %378 = vsyncadd [#allocation6], %s377
          %381 = dma.smem_to_hbm [#allocation9], 16, %s2, [#allocation6]
        $region48: #{tpu_custom_call.1} parent=27 // pred_fallthru
          _
        // Predicated region
        $region49: #{tpu_custom_call.1} parent=27 // pred_check
          %p382 = pneg %p85
        $region50: #{tpu_custom_call.1} parent=27 // pred_check_branch
          %384 = sbr.rel (%p382) target = $region52
        $region51: #{tpu_custom_call.1} parent=27 // pred_region
          %385 = dma.done [#allocation6], 16
        $region52: #{tpu_custom_call.1} parent=27 // pred_fallthru
          _
        %386 = sfence
      $region28: #{tpu_custom_call.1} parent=5 // pred_fallthru
        _
      %p387 = scmp.le.s32.totalorder 2, %s15
      // Predicated region
      $region53: #{tpu_custom_call.1} parent=5 // pred_check
        %p388 = pneg %p387
      $region54: #{tpu_custom_call.1} parent=5 // pred_check_branch
        %390 = sbr.rel (%p388) target = $region56
      $region55: #{tpu_custom_call.1} parent=5 // pred_region
        %s391 = ssub.s32 %s15, 2
      $region56: #{tpu_custom_call.1} parent=5 // pred_fallthru
        _
    $region6: #{tpu_custom_call.1} parent=1 // loop_footer
      %s19 = sadd.s32 1, %s15
    $region7: #{tpu_custom_call.1} parent=1 // loop_footer_branch
      %14 = sbr.rel target = $region3
    $region8: #{tpu_custom_call.1} parent=1 // loop_exit
      _
    %392 = vsyncpa [#allocation5], 1
    %s393 = scalar_lea.sflag [#allocation5], 1
    %394 = vsyncpa %s393, 1
    %395 = vsyncpa [#allocation8], 1
    %s396 = scalar_lea.sflag [#allocation8], 1
    %397 = vsyncpa %s396, 1
    %398 = vsyncpa [#allocation6], 1
    %s399 = scalar_lea.sflag [#allocation6], 1
    %400 = vsyncpa %s399, 1

</llo_original>
